<compile_context>
chip_gen: v7x
topology: tpu7x:2x2x1
jax: 0.10.0
libtpu: 0.0.40
codegen_flags: <defaults>
</compile_context>

<pallas_src>
import functools

import jax
import jax.numpy as jnp
from jax.experimental import pallas as pl
from jax.experimental.pallas import tpu as pltpu


def mlp_kernel(x_ref, w1_ref, b1_ref, w2_ref, b2_ref, w3_ref, b3_ref, o_ref):
    # x arrives fp32 and is cast to bf16 on the VPU (cheap, hidden under DMA/MXU).
    # Weights are pre-cast bf16; biases fp32.  Matmuls accumulate in fp32 on the
    # MXU; bias-add / ReLU run in fp32, then cast back to bf16 for the next pass.
    x = x_ref[...].astype(jnp.bfloat16)
    h = jnp.dot(x, w1_ref[...], preferred_element_type=jnp.float32) + b1_ref[...]
    h = jnp.maximum(h, 0.0).astype(jnp.bfloat16)
    h = jnp.dot(h, w2_ref[...], preferred_element_type=jnp.float32) + b2_ref[...]
    h = jnp.maximum(h, 0.0).astype(jnp.bfloat16)
    h = jnp.dot(h, w3_ref[...], preferred_element_type=jnp.float32) + b3_ref[...]
    h = jnp.maximum(h, 0.0).astype(jnp.bfloat16)
    # fc3 applied a second time, no ReLU (matches the PyTorch forward).
    o_ref[...] = (
        jnp.dot(h, w3_ref[...], preferred_element_type=jnp.float32) + b3_ref[...]
    ).astype(o_ref.dtype)


def _round_up(n, m):
    return ((n + m - 1) // m) * m


def prepare_params(params_fp32):
    """One-time parameter prep (call once, outside the hot path): cast weights
    to MXU-native bf16.  Biases stay fp32 for the fp32 epilogue."""
    return tuple((w.astype(jnp.bfloat16), b) for (w, b) in params_fp32)


def choose_tile_b(batch):
    """Batch tile heuristic: >=2 parallel grid steps on dual-TC chips (v7x),
    one large tile on single-TC chips (v5e/v6e)."""
    try:
        n_cores = max(1, int(getattr(jax.devices()[0], "num_cores", 1)))
    except Exception:  # noqa: BLE001  (best-effort hardware query)
        n_cores = 1
    if n_cores > 1:
        target_steps = max(2, n_cores)
        tb = max(8, _round_up(pl.cdiv(batch, target_steps), 8))
        return int(min(tb, 512))
    # Single TensorCore: cover the batch in as few steps as possible.
    return int(min(_round_up(batch, 8), 2048))


@functools.partial(jax.jit, static_argnames=("tile_b", "out_dtype"))
def mlp_forward(x, params, *, tile_b=128, out_dtype=jnp.float32):
    """x: (B, state_size) fp32.  params: ((w1,b1),(w2,b2),(w3,b3)) with weights
    stored transposed as (in_features, out_features) and pre-cast to bf16 via
    prepare_params(); biases fp32 of shape (1, out_features)."""
    (w1, b1), (w2, b2), (w3, b3) = params
    B, K = x.shape
    H = w3.shape[1]

    # Pad only the batch dim (no-op when already aligned to the tile).
    tile_b = min(tile_b, _round_up(B, 8))
    B_pad = _round_up(B, tile_b)
    if B_pad != B:
        x = jnp.pad(x, ((0, B_pad - B), (0, 0)))

    grid = (B_pad // tile_b,)
    # Weights / biases: full block, constant index_map -> resident in VMEM.
    resident = lambda shape: pl.BlockSpec(shape, lambda i: tuple(0 for _ in shape))

    flops = 2 * B_pad * (K * H + 3 * H * H)
    bytes_accessed = (
        B_pad * K * x.dtype.itemsize                     # x read
        + (K * H + 2 * H * H) * 2 + 3 * H * 4            # bf16 weights + fp32 biases
        + B_pad * H * jnp.dtype(out_dtype).itemsize      # output write
    )

    out = pl.pallas_call(
        mlp_kernel,
        out_shape=jax.ShapeDtypeStruct((B_pad, H), out_dtype),
        grid=grid,
        in_specs=[
            # x tiled over batch; K is the full array dim (exempt from 128-lane rule).
            pl.BlockSpec((tile_b, K), lambda i: (i, 0)),
            resident(w1.shape), resident(b1.shape),
            resident(w2.shape), resident(b2.shape),
            resident(w3.shape), resident(b3.shape),
        ],
        out_specs=pl.BlockSpec((tile_b, H), lambda i: (i, 0)),
        compiler_params=pltpu.CompilerParams(
            dimension_semantics=("parallel",),   # megacore-splittable on v7x
        ),
        cost_estimate=pl.CostEstimate(
            flops=int(flops), transcendentals=0, bytes_accessed=int(bytes_accessed)
        ),
    )(x, w1, b1, w2, b2, w3, b3)

    return out[:B]


def init_linear(key, in_features, out_features):
    # PyTorch nn.Linear-style uniform init, deterministic via PRNGKey.
    kw, kb = jax.random.split(key)
    bound = 1.0 / jnp.sqrt(in_features)
    # store weight already transposed: (in_features, out_features)
    w = jax.random.uniform(kw, (in_features, out_features), jnp.float32, -bound, bound)
    b = jax.random.uniform(kb, (1, out_features), jnp.float32, -bound, bound)
    return w, b


def reference_forward_bf16(x, params_fp32):
    # Same bf16-weight / fp32-accumulate path as the kernel (tight check).
    (w1, b1), (w2, b2), (w3, b3) = params_fp32
    bf = jnp.bfloat16
    dot = lambda a, b: jnp.dot(a.astype(bf), b.astype(bf),
                               preferred_element_type=jnp.float32)
    h = jnp.maximum(dot(x, w1) + b1, 0.0)
    h = jnp.maximum(dot(h, w2) + b2, 0.0)
    h = jnp.maximum(dot(h, w3) + b3, 0.0)
    return dot(h, w3) + b3


def reference_forward_fp32(x, params_fp32):
    (w1, b1), (w2, b2), (w3, b3) = params_fp32
    h = jnp.maximum(x @ w1 + b1, 0.0)
    h = jnp.maximum(h @ w2 + b2, 0.0)
    h = jnp.maximum(h @ w3 + b3, 0.0)
    return h @ w3 + b3


if __name__ == "__main__":
    # Batched so the grid can have >= 2 tiles on dual-TC chips and MXU rows fill.
    batch = 256
    state_size = 32       # flattened observation size (synthetic)
    hidden_size = 128     # module default

    key = jax.random.PRNGKey(0)
    k_x, k1, k2, k3 = jax.random.split(key, 4)

    x = jax.random.normal(k_x, (batch, state_size), jnp.float32)
    params_fp32 = (
        init_linear(k1, state_size, hidden_size),   # fc1
        init_linear(k2, hidden_size, hidden_size),  # fc2
        init_linear(k3, hidden_size, hidden_size),  # fc3 (used twice in forward)
    )
    # TODO(synk): fc4 exists in __init__ but is never used in forward, so it is omitted.

    # One-time weight prep (bf16 cast) outside the jitted hot path.
    params = prepare_params(params_fp32)
    tile_b = choose_tile_b(batch)

    out = mlp_forward(x, params, tile_b=tile_b)
    jax.block_until_ready(out)

    assert out.shape == (batch, hidden_size)
    # Tight check against an identical bf16-weight / fp32-accumulate reference.
    ref_bf16 = reference_forward_bf16(x, params_fp32)
    assert jnp.allclose(out, ref_bf16, atol=2e-3, rtol=2e-3)
    # Loose check against the exact fp32 PyTorch-equivalent forward.
    ref_fp32 = reference_forward_fp32(x, params_fp32)
    assert jnp.allclose(out, ref_fp32, atol=5e-2, rtol=5e-2)

    print("KERNEL_OK")
</pallas_src>

<mosaic_0001>
module attributes {stable_mosaic.version = 11 : i64} {
  func.func @mlp_kernel(%arg0: i32, %arg1: memref<256x32xf32, #tpu.memory_space<vmem>>, %arg2: memref<32x128xbf16, #tpu.memory_space<vmem>>, %arg3: memref<1x128xf32, #tpu.memory_space<vmem>>, %arg4: memref<128x128xbf16, #tpu.memory_space<vmem>>, %arg5: memref<1x128xf32, #tpu.memory_space<vmem>>, %arg6: memref<128x128xbf16, #tpu.memory_space<vmem>>, %arg7: memref<1x128xf32, #tpu.memory_space<vmem>>, %arg8: memref<256x128xf32, #tpu.memory_space<vmem>>) attributes {dimension_semantics = [#tpu.dimension_semantics<parallel>], iteration_bounds = array<i64: 1>, scalar_prefetch = 0 : i64, scratch_operands = 0 : i64, tpu.core_type = #tpu.core_type<tc>, window_params = [{transform_indices = @transform_0, window_bounds = array<i64: 256, 32>}, {pipeline_mode = #tpu.pipeline_mode<synchronous>, transform_indices = @transform_1, window_bounds = array<i64: 32, 128>}, {pipeline_mode = #tpu.pipeline_mode<synchronous>, transform_indices = @transform_2, window_bounds = array<i64: 1, 128>}, {pipeline_mode = #tpu.pipeline_mode<synchronous>, transform_indices = @transform_3, window_bounds = array<i64: 128, 128>}, {pipeline_mode = #tpu.pipeline_mode<synchronous>, transform_indices = @transform_4, window_bounds = array<i64: 1, 128>}, {pipeline_mode = #tpu.pipeline_mode<synchronous>, transform_indices = @transform_5, window_bounds = array<i64: 128, 128>}, {pipeline_mode = #tpu.pipeline_mode<synchronous>, transform_indices = @transform_6, window_bounds = array<i64: 1, 128>}, {transform_indices = @transform_7, window_bounds = array<i64: 256, 128>}]} {
    %c0 = arith.constant 0 : index
    %c0_0 = arith.constant 0 : index
    %0 = vector.load %arg1[%c0, %c0_0] : memref<256x32xf32, #tpu.memory_space<vmem>>, vector<256x32xf32>
    %1 = arith.truncf %0 : vector<256x32xf32> to vector<256x32xbf16>
    %c0_1 = arith.constant 0 : index
    %c0_2 = arith.constant 0 : index
    %2 = vector.load %arg2[%c0_1, %c0_2] : memref<32x128xbf16, #tpu.memory_space<vmem>>, vector<32x128xbf16>
    %cst = arith.constant dense<0.000000e+00> : vector<256x128xf32>
    %3 = tpu.matmul %1, %2, %cst {dimension_numbers = #tpu.dot_dimension_numbers<[1], [0], [0], [1], [0, 0, 1, 1], [], []>} : vector<256x32xbf16>, vector<32x128xbf16>, vector<256x128xf32> -> vector<256x128xf32>
    %c0_3 = arith.constant 0 : index
    %c0_4 = arith.constant 0 : index
    %4 = vector.load %arg3[%c0_3, %c0_4] : memref<1x128xf32, #tpu.memory_space<vmem>>, vector<1x128xf32>
    %5 = vector.broadcast %4 : vector<1x128xf32> to vector<256x128xf32>
    %6 = arith.addf %3, %5 : vector<256x128xf32>
    %cst_5 = arith.constant 0.000000e+00 : f32
    %7 = vector.broadcast %cst_5 : f32 to vector<256x128xf32>
    %8 = arith.maximumf %6, %7 : vector<256x128xf32>
    %9 = arith.truncf %8 : vector<256x128xf32> to vector<256x128xbf16>
    %c0_6 = arith.constant 0 : index
    %c0_7 = arith.constant 0 : index
    %10 = vector.load %arg4[%c0_6, %c0_7] : memref<128x128xbf16, #tpu.memory_space<vmem>>, vector<128x128xbf16>
    %cst_8 = arith.constant dense<0.000000e+00> : vector<256x128xf32>
    %11 = tpu.matmul %9, %10, %cst_8 {dimension_numbers = #tpu.dot_dimension_numbers<[1], [0], [0], [1], [0, 0, 1, 1], [], []>} : vector<256x128xbf16>, vector<128x128xbf16>, vector<256x128xf32> -> vector<256x128xf32>
    %c0_9 = arith.constant 0 : index
    %c0_10 = arith.constant 0 : index
    %12 = vector.load %arg5[%c0_9, %c0_10] : memref<1x128xf32, #tpu.memory_space<vmem>>, vector<1x128xf32>
    %13 = vector.broadcast %12 : vector<1x128xf32> to vector<256x128xf32>
    %14 = arith.addf %11, %13 : vector<256x128xf32>
    %cst_11 = arith.constant 0.000000e+00 : f32
    %15 = vector.broadcast %cst_11 : f32 to vector<256x128xf32>
    %16 = arith.maximumf %14, %15 : vector<256x128xf32>
    %17 = arith.truncf %16 : vector<256x128xf32> to vector<256x128xbf16>
    %c0_12 = arith.constant 0 : index
    %c0_13 = arith.constant 0 : index
    %18 = vector.load %arg6[%c0_12, %c0_13] : memref<128x128xbf16, #tpu.memory_space<vmem>>, vector<128x128xbf16>
    %cst_14 = arith.constant dense<0.000000e+00> : vector<256x128xf32>
    %19 = tpu.matmul %17, %18, %cst_14 {dimension_numbers = #tpu.dot_dimension_numbers<[1], [0], [0], [1], [0, 0, 1, 1], [], []>} : vector<256x128xbf16>, vector<128x128xbf16>, vector<256x128xf32> -> vector<256x128xf32>
    %c0_15 = arith.constant 0 : index
    %c0_16 = arith.constant 0 : index
    %20 = vector.load %arg7[%c0_15, %c0_16] : memref<1x128xf32, #tpu.memory_space<vmem>>, vector<1x128xf32>
    %21 = vector.broadcast %20 : vector<1x128xf32> to vector<256x128xf32>
    %22 = arith.addf %19, %21 : vector<256x128xf32>
    %cst_17 = arith.constant 0.000000e+00 : f32
    %23 = vector.broadcast %cst_17 : f32 to vector<256x128xf32>
    %24 = arith.maximumf %22, %23 : vector<256x128xf32>
    %25 = arith.truncf %24 : vector<256x128xf32> to vector<256x128xbf16>
    %c0_18 = arith.constant 0 : index
    %c0_19 = arith.constant 0 : index
    %26 = vector.load %arg6[%c0_18, %c0_19] : memref<128x128xbf16, #tpu.memory_space<vmem>>, vector<128x128xbf16>
    %cst_20 = arith.constant dense<0.000000e+00> : vector<256x128xf32>
    %27 = tpu.matmul %25, %26, %cst_20 {dimension_numbers = #tpu.dot_dimension_numbers<[1], [0], [0], [1], [0, 0, 1, 1], [], []>} : vector<256x128xbf16>, vector<128x128xbf16>, vector<256x128xf32> -> vector<256x128xf32>
    %c0_21 = arith.constant 0 : index
    %c0_22 = arith.constant 0 : index
    %28 = vector.load %arg7[%c0_21, %c0_22] : memref<1x128xf32, #tpu.memory_space<vmem>>, vector<1x128xf32>
    %29 = vector.broadcast %28 : vector<1x128xf32> to vector<256x128xf32>
    %30 = arith.addf %27, %29 : vector<256x128xf32>
    %c0_23 = arith.constant 0 : index
    %c0_24 = arith.constant 0 : index
    %31 = vector.load %arg8[%c0_23, %c0_24] : memref<256x128xf32, #tpu.memory_space<vmem>>, vector<256x128xf32>
    tpu.vector_store %arg8[%c0_23, %c0_24], %30 {strides = array<i32>} : memref<256x128xf32, #tpu.memory_space<vmem>>, vector<256x128xf32>,
    return
  }
  func.func @transform_0(%arg0: i32) -> (i32, i32) {
    %c0_i32 = arith.constant 0 : i32
    %c0_i32_0 = arith.constant 0 : i32
    return %arg0, %c0_i32 : i32, i32
  }
  func.func @transform_1(%arg0: i32) -> (i32, i32) {
    %c0_i32 = arith.constant 0 : i32
    %c0_i32_0 = arith.constant 0 : i32
    %c0_i32_1 = arith.constant 0 : i32
    return %c0_i32, %c0_i32_0 : i32, i32
  }
  func.func @transform_2(%arg0: i32) -> (i32, i32) {
    %c0_i32 = arith.constant 0 : i32
    %c0_i32_0 = arith.constant 0 : i32
    %c0_i32_1 = arith.constant 0 : i32
    return %c0_i32, %c0_i32_0 : i32, i32
  }
  func.func @transform_3(%arg0: i32) -> (i32, i32) {
    %c0_i32 = arith.constant 0 : i32
    %c0_i32_0 = arith.constant 0 : i32
    %c0_i32_1 = arith.constant 0 : i32
    return %c0_i32, %c0_i32_0 : i32, i32
  }
  func.func @transform_4(%arg0: i32) -> (i32, i32) {
    %c0_i32 = arith.constant 0 : i32
    %c0_i32_0 = arith.constant 0 : i32
    %c0_i32_1 = arith.constant 0 : i32
    return %c0_i32, %c0_i32_0 : i32, i32
  }
  func.func @transform_5(%arg0: i32) -> (i32, i32) {
    %c0_i32 = arith.constant 0 : i32
    %c0_i32_0 = arith.constant 0 : i32
    %c0_i32_1 = arith.constant 0 : i32
    return %c0_i32, %c0_i32_0 : i32, i32
  }
  func.func @transform_6(%arg0: i32) -> (i32, i32) {
    %c0_i32 = arith.constant 0 : i32
    %c0_i32_0 = arith.constant 0 : i32
    %c0_i32_1 = arith.constant 0 : i32
    return %c0_i32, %c0_i32_0 : i32, i32
  }
  func.func @transform_7(%arg0: i32) -> (i32, i32) {
    %c0_i32 = arith.constant 0 : i32
    %c0_i32_0 = arith.constant 0 : i32
    return %arg0, %c0_i32 : i32, i32
  }
}

</mosaic_0001>

<llo_original>
// kernel: mlp_forward.1
$region0: #{mlp_forward.1}
  #allocation0 [shape = 'u32[]', space=smem, size = 0x4, offset = 0x4, fixed_abs, tag = 'smem constant byte address 0x4 - core index']
  #allocation1 [shape = 'u32[144,128]{1,0:T(1,128)}', space=vmem, size = 0x12000, scoped, tag = 'internal scratch']
  %s0 = inlined_call_operand.vmem [shape: f32[256,32], index: 0, kind: input, shape index: {}]
  %s1 = inlined_call_operand.vmem [shape: bf16[32,128], index: 1, kind: input, shape index: {}]
  %s2 = inlined_call_operand.vmem [shape: f32[1,128], index: 2, kind: input, shape index: {}]
  %s3 = inlined_call_operand.vmem [shape: bf16[128,128], index: 3, kind: input, shape index: {}]
  %s4 = inlined_call_operand.vmem [shape: f32[1,128], index: 4, kind: input, shape index: {}]
  %s5 = inlined_call_operand.vmem [shape: bf16[128,128], index: 5, kind: input, shape index: {}]
  %s6 = inlined_call_operand.vmem [shape: f32[1,128], index: 6, kind: input, shape index: {}]
  %s7 = inlined_call_operand.hbm [shape: f32[256,128], index: 7, kind: output, shape index: {}]
  %s8 = sld [smem:[#allocation0]]
  $region38: #{mlp_forward.1} parent=0
    _
  %s10 = ssub.s32 1, %s8
  %s11 = scalar_select 0, %s10, %s8
  $region1: #{mlp_forward.1} parent=0
    #allocation2 [shape = 'u8[131072]{0}', space=vmem, size = 0x20000, scoped, tag = 'output window, operand 0, single buffered']
    #allocation3 [shape = 's32[1]{0}', space=sflag, size = 0x4, scoped, tag = 'scoped memory for mlp_forward.1']
    %12 = vsyncpa [#allocation3], 0
    // Predicated region
    $region2: #{mlp_forward.1} parent=1 // pred_check
      _
    $region3: #{mlp_forward.1} parent=1 // pred_check_branch
      %14 = sbr.rel (0) target = $region5
    $region4: #{mlp_forward.1} parent=1 // pred_region
      _
    $region5: #{mlp_forward.1} parent=1 // pred_fallthru
      _
    // Predicated region
    $region6: #{mlp_forward.1} parent=1 // pred_check
      _
    $region7: #{mlp_forward.1} parent=1 // pred_check_branch
      %16 = sbr.rel (0) target = $region9
    $region8: #{mlp_forward.1} parent=1 // pred_region
      _
    $region9: #{mlp_forward.1} parent=1 // pred_fallthru
      _
    // Predicated region
    $region10: #{mlp_forward.1} parent=1 // pred_check
      _
    $region11: #{mlp_forward.1} parent=1 // pred_check_branch
      %18 = sbr.rel (0) target = $region13
    $region12: #{mlp_forward.1} parent=1 // pred_region
      _
    $region13: #{mlp_forward.1} parent=1 // pred_fallthru
      _
    // Predicated region
    $region14: #{mlp_forward.1} parent=1 // pred_check
      _
    $region15: #{mlp_forward.1} parent=1 // pred_check_branch
      %20 = sbr.rel (0) target = $region17
    $region16: #{mlp_forward.1} parent=1 // pred_region
      _
    $region17: #{mlp_forward.1} parent=1 // pred_fallthru
      _
    // Predicated region
    $region18: #{mlp_forward.1} parent=1 // pred_check
      _
    $region19: #{mlp_forward.1} parent=1 // pred_check_branch
      %22 = sbr.rel (0) target = $region21
    $region20: #{mlp_forward.1} parent=1 // pred_region
      _
    $region21: #{mlp_forward.1} parent=1 // pred_fallthru
      _
    // Predicated region
    $region22: #{mlp_forward.1} parent=1 // pred_check
      _
    $region23: #{mlp_forward.1} parent=1 // pred_check_branch
      %24 = sbr.rel (0) target = $region25
    $region24: #{mlp_forward.1} parent=1 // pred_region
      _
    $region25: #{mlp_forward.1} parent=1 // pred_fallthru
      _
    // Predicated region
    $region26: #{mlp_forward.1} parent=1 // pred_check
      _
    $region27: #{mlp_forward.1} parent=1 // pred_check_branch
      %26 = sbr.rel (0) target = $region29
    $region28: #{mlp_forward.1} parent=1 // pred_region
      _
    $region29: #{mlp_forward.1} parent=1 // pred_fallthru
      _
    %v28 = vld [vmem:[%s0] sm:$0xff]
    %v29 = vld [vmem:[%s0 + $0x8] sm:$0xff]
    %v30 = vld [vmem:[%s0 + $0x10] sm:$0xff]
    %v31 = vld [vmem:[%s0 + $0x18] sm:$0xff]
    %v32 = vld [vmem:[%s0 + $0x20] sm:$0xff]
    %v33 = vld [vmem:[%s0 + $0x28] sm:$0xff]
    %v34 = vld [vmem:[%s0 + $0x30] sm:$0xff]
    %v35 = vld [vmem:[%s0 + $0x38] sm:$0xff]
    %v36 = vld [vmem:[%s0 + $0x40] sm:$0xff]
    %v37 = vld [vmem:[%s0 + $0x48] sm:$0xff]
    %v38 = vld [vmem:[%s0 + $0x50] sm:$0xff]
    %v39 = vld [vmem:[%s0 + $0x58] sm:$0xff]
    %v40 = vld [vmem:[%s0 + $0x60] sm:$0xff]
    %v41 = vld [vmem:[%s0 + $0x68] sm:$0xff]
    %v42 = vld [vmem:[%s0 + $0x70] sm:$0xff]
    %v43 = vld [vmem:[%s0 + $0x78] sm:$0xff]
    %v44 = vld [vmem:[%s0 + $0x80] sm:$0xff]
    %v45 = vld [vmem:[%s0 + $0x88] sm:$0xff]
    %v46 = vld [vmem:[%s0 + $0x90] sm:$0xff]
    %v47 = vld [vmem:[%s0 + $0x98] sm:$0xff]
    %v48 = vld [vmem:[%s0 + $0xa0] sm:$0xff]
    %v49 = vld [vmem:[%s0 + $0xa8] sm:$0xff]
    %v50 = vld [vmem:[%s0 + $0xb0] sm:$0xff]
    %v51 = vld [vmem:[%s0 + $0xb8] sm:$0xff]
    %v52 = vld [vmem:[%s0 + $0xc0] sm:$0xff]
    %v53 = vld [vmem:[%s0 + $0xc8] sm:$0xff]
    %v54 = vld [vmem:[%s0 + $0xd0] sm:$0xff]
    %v55 = vld [vmem:[%s0 + $0xd8] sm:$0xff]
    %v56 = vld [vmem:[%s0 + $0xe0] sm:$0xff]
    %v57 = vld [vmem:[%s0 + $0xe8] sm:$0xff]
    %v58 = vld [vmem:[%s0 + $0xf0] sm:$0xff]
    %v59 = vld [vmem:[%s0 + $0xf8] sm:$0xff]
    %v60 = vpack.c.bf16 %v29, %v28
    %v61 = vpack.c.bf16 %v31, %v30
    %v62 = vpack.c.bf16 %v33, %v32
    %v63 = vpack.c.bf16 %v35, %v34
    %v64 = vpack.c.bf16 %v37, %v36
    %v65 = vpack.c.bf16 %v39, %v38
    %v66 = vpack.c.bf16 %v41, %v40
    %v67 = vpack.c.bf16 %v43, %v42
    %v68 = vpack.c.bf16 %v45, %v44
    %v69 = vpack.c.bf16 %v47, %v46
    %v70 = vpack.c.bf16 %v49, %v48
    %v71 = vpack.c.bf16 %v51, %v50
    %v72 = vpack.c.bf16 %v53, %v52
    %v73 = vpack.c.bf16 %v55, %v54
    %v74 = vpack.c.bf16 %v57, %v56
    %v75 = vpack.c.bf16 %v59, %v58
    %v76 = vld [vmem:[%s1] sm:$0xf]
    %v77 = vld [vmem:[%s1 + $0x4] sm:$0xf]
    %v78 = vld [vmem:[%s1 + $0x8] sm:$0xf]
    %v79 = vld [vmem:[%s1 + $0xc] sm:$0xf]
    %v80 = vld [vmem:[%s2] sm:$0x1]
    %v82 = vlaneseq
    %v83 = vshrl.u32 %v82, 7
    %v84 = vsub.s32 0, %v83
    %v85 = vrot.slane %v80, %v84
    %v91 = vunpack.c.l.b16 %v76
    %v92 = vunpack.c.l.b16 %v77
    %v93 = vunpack.c.l.b16 %v78
    %v94 = vunpack.c.l.b16 %v79
    %v95 = vpack.c.b16 %v92, %v91
    %v96 = vpack.c.b16 %v94, %v93
    %vm99 = vcmask 261120
    %v101 = vsel %vm99, %v60, 0
    %v104 = vsel %vm99, %v61, 0
    %v107 = vsel %vm99, %v62, 0
    %v110 = vsel %vm99, %v63, 0
    %v113 = vsel %vm99, %v64, 0
    %v116 = vsel %vm99, %v65, 0
    %v119 = vsel %vm99, %v66, 0
    %v122 = vsel %vm99, %v67, 0
    %v125 = vsel %vm99, %v68, 0
    %v128 = vsel %vm99, %v69, 0
    %v131 = vsel %vm99, %v70, 0
    %v134 = vsel %vm99, %v71, 0
    %v137 = vsel %vm99, %v72, 0
    %v140 = vsel %vm99, %v73, 0
    %v143 = vsel %vm99, %v74, 0
    %v146 = vsel %vm99, %v75, 0
    %148 = vmatprep.subr.bf16.mxu0 0
    %149 = vmatpush1.bf16.msra.mxu0 %v95
    %150 = vmatprep.subr.bf16.mxu0 0
    %151 = vmatpush1.bf16.msra.mxu0 %v96
    %152 = vmatprep.subr.bf16.mxu0 0
    %153 = vmatpush1.bf16.msra.mxu0 0
    %154 = vmatprep.subr.bf16.mxu0 0
    %155 = vmatpush1.bf16.msra.mxu0 0
    %156 = vmatprep.subr.bf16.mxu0 0
    %157 = vmatpush1.bf16.msra.mxu0 0
    %158 = vmatprep.subr.bf16.mxu0 0
    %159 = vmatpush1.bf16.msra.mxu0 0
    %160 = vmatprep.subr.bf16.mxu0 0
    %161 = vmatpush1.bf16.msra.mxu0 0
    %162 = vmatprep.subr.bf16.mxu0 0
    %163 = vmatpush1.bf16.msra.mxu0 0
    %164 = vmatprep.subr.bf16.mxu0 0
    %165 = vmatpush1.bf16.msra.mxu0 0
    %166 = vmatprep.subr.bf16.mxu0 0
    %167 = vmatpush1.bf16.msra.mxu0 0
    %168 = vmatprep.subr.bf16.mxu0 0
    %169 = vmatpush1.bf16.msra.mxu0 0
    %170 = vmatprep.subr.bf16.mxu0 0
    %171 = vmatpush1.bf16.msra.mxu0 0
    %172 = vmatprep.subr.bf16.mxu0 0
    %173 = vmatpush1.bf16.msra.mxu0 0
    %174 = vmatprep.subr.bf16.mxu0 0
    %175 = vmatpush1.bf16.msra.mxu0 0
    %176 = vmatprep.subr.bf16.mxu0 0
    %177 = vmatpush1.bf16.msra.mxu0 0
    %178 = vmatprep.subr.bf16.mxu0 0
    %179 = vmatpush1.bf16.msra.mxu0 0
    %180 = vmatprep.mubr.bf16.mxu0 0
    %181 = vmatmul.mubr.bf16.gmra.mrb[0].mxu0 %v101
    %v182 = vpop.f32.mrb[0].mxu0
    %v183 = vadd.f32 %v85, %v182
    %v184 = vpop.f32.mrb[0].mxu0
    %v185 = vpop.f32.mrb[0].mxu0
    %v186 = vadd.f32 %v85, %v185
    %v187 = vpop.f32.mrb[0].mxu0
    %188 = vmatprep.mubr.bf16.mxu0 0
    %189 = vmatmul.mubr.bf16.gmra.mrb[0].mxu0 %v104
    %v190 = vpop.f32.mrb[0].mxu0
    %v191 = vadd.f32 %v85, %v190
    %v192 = vpop.f32.mrb[0].mxu0
    %v193 = vpop.f32.mrb[0].mxu0
    %v194 = vadd.f32 %v85, %v193
    %v195 = vpop.f32.mrb[0].mxu0
    %196 = vmatprep.mubr.bf16.mxu0 0
    %197 = vmatmul.mubr.bf16.gmra.mrb[0].mxu0 %v107
    %v198 = vpop.f32.mrb[0].mxu0
    %v199 = vadd.f32 %v85, %v198
    %v200 = vpop.f32.mrb[0].mxu0
    %v201 = vpop.f32.mrb[0].mxu0
    %v202 = vadd.f32 %v85, %v201
    %v203 = vpop.f32.mrb[0].mxu0
    %204 = vmatprep.mubr.bf16.mxu0 0
    %205 = vmatmul.mubr.bf16.gmra.mrb[0].mxu0 %v110
    %v206 = vpop.f32.mrb[0].mxu0
    %v207 = vadd.f32 %v85, %v206
    %v208 = vpop.f32.mrb[0].mxu0
    %v209 = vpop.f32.mrb[0].mxu0
    %v210 = vadd.f32 %v85, %v209
    %v211 = vpop.f32.mrb[0].mxu0
    %212 = vmatprep.mubr.bf16.mxu0 0
    %213 = vmatmul.mubr.bf16.gmra.mrb[0].mxu0 %v113
    %v214 = vpop.f32.mrb[0].mxu0
    %v215 = vadd.f32 %v85, %v214
    %v216 = vpop.f32.mrb[0].mxu0
    %v217 = vpop.f32.mrb[0].mxu0
    %v218 = vadd.f32 %v85, %v217
    %v219 = vpop.f32.mrb[0].mxu0
    %220 = vmatprep.mubr.bf16.mxu0 0
    %221 = vmatmul.mubr.bf16.gmra.mrb[0].mxu0 %v116
    %v222 = vpop.f32.mrb[0].mxu0
    %v223 = vadd.f32 %v85, %v222
    %v224 = vpop.f32.mrb[0].mxu0
    %v225 = vpop.f32.mrb[0].mxu0
    %v226 = vadd.f32 %v85, %v225
    %v227 = vpop.f32.mrb[0].mxu0
    %228 = vmatprep.mubr.bf16.mxu0 0
    %229 = vmatmul.mubr.bf16.gmra.mrb[0].mxu0 %v119
    %v230 = vpop.f32.mrb[0].mxu0
    %v231 = vadd.f32 %v85, %v230
    %v232 = vpop.f32.mrb[0].mxu0
    %v233 = vpop.f32.mrb[0].mxu0
    %v234 = vadd.f32 %v85, %v233
    %v235 = vpop.f32.mrb[0].mxu0
    %236 = vmatprep.mubr.bf16.mxu0 0
    %237 = vmatmul.mubr.bf16.gmra.mrb[0].mxu0 %v122
    %v238 = vpop.f32.mrb[0].mxu0
    %v239 = vadd.f32 %v85, %v238
    %v240 = vpop.f32.mrb[0].mxu0
    %v241 = vpop.f32.mrb[0].mxu0
    %v242 = vadd.f32 %v85, %v241
    %v243 = vpop.f32.mrb[0].mxu0
    %244 = vmatprep.mubr.bf16.mxu0 0
    %245 = vmatmul.mubr.bf16.gmra.mrb[0].mxu0 %v125
    %v246 = vpop.f32.mrb[0].mxu0
    %v247 = vadd.f32 %v85, %v246
    %v248 = vpop.f32.mrb[0].mxu0
    %v249 = vpop.f32.mrb[0].mxu0
    %v250 = vadd.f32 %v85, %v249
    %v251 = vpop.f32.mrb[0].mxu0
    %252 = vmatprep.mubr.bf16.mxu0 0
    %253 = vmatmul.mubr.bf16.gmra.mrb[0].mxu0 %v128
    %v254 = vpop.f32.mrb[0].mxu0
    %v255 = vadd.f32 %v85, %v254
    %v256 = vpop.f32.mrb[0].mxu0
    %v257 = vpop.f32.mrb[0].mxu0
    %v258 = vadd.f32 %v85, %v257
    %v259 = vpop.f32.mrb[0].mxu0
    %260 = vmatprep.mubr.bf16.mxu0 0
    %261 = vmatmul.mubr.bf16.gmra.mrb[0].mxu0 %v131
    %v262 = vpop.f32.mrb[0].mxu0
    %v263 = vadd.f32 %v85, %v262
    %v264 = vpop.f32.mrb[0].mxu0
    %v265 = vpop.f32.mrb[0].mxu0
    %v266 = vadd.f32 %v85, %v265
    %v267 = vpop.f32.mrb[0].mxu0
    %268 = vmatprep.mubr.bf16.mxu0 0
    %269 = vmatmul.mubr.bf16.gmra.mrb[0].mxu0 %v134
    %v270 = vpop.f32.mrb[0].mxu0
    %v271 = vadd.f32 %v85, %v270
    %v272 = vpop.f32.mrb[0].mxu0
    %v273 = vpop.f32.mrb[0].mxu0
    %v274 = vadd.f32 %v85, %v273
    %v275 = vpop.f32.mrb[0].mxu0
    %276 = vmatprep.mubr.bf16.mxu0 0
    %277 = vmatmul.mubr.bf16.gmra.mrb[0].mxu0 %v137
    %v278 = vpop.f32.mrb[0].mxu0
    %v279 = vadd.f32 %v85, %v278
    %v280 = vpop.f32.mrb[0].mxu0
    %v281 = vpop.f32.mrb[0].mxu0
    %v282 = vadd.f32 %v85, %v281
    %v283 = vpop.f32.mrb[0].mxu0
    %284 = vmatprep.mubr.bf16.mxu0 0
    %285 = vmatmul.mubr.bf16.gmra.mrb[0].mxu0 %v140
    %v286 = vpop.f32.mrb[0].mxu0
    %v287 = vadd.f32 %v85, %v286
    %v288 = vpop.f32.mrb[0].mxu0
    %v289 = vpop.f32.mrb[0].mxu0
    %v290 = vadd.f32 %v85, %v289
    %v291 = vpop.f32.mrb[0].mxu0
    %292 = vmatprep.mubr.bf16.mxu0 0
    %293 = vmatmul.mubr.bf16.gmra.mrb[0].mxu0 %v143
    %v294 = vpop.f32.mrb[0].mxu0
    %v295 = vadd.f32 %v85, %v294
    %v296 = vpop.f32.mrb[0].mxu0
    %v297 = vpop.f32.mrb[0].mxu0
    %v298 = vadd.f32 %v85, %v297
    %v299 = vpop.f32.mrb[0].mxu0
    %300 = vmatprep.mubr.bf16.mxu0 0
    %301 = vmatmul.mubr.bf16.gmra.mrb[0].mxu0 %v146
    %v302 = vpop.f32.mrb[0].mxu0
    %v303 = vadd.f32 %v85, %v302
    %v304 = vpop.f32.mrb[0].mxu0
    %v305 = vpop.f32.mrb[0].mxu0
    %v306 = vadd.f32 %v85, %v305
    %v307 = vpop.f32.mrb[0].mxu0
    %308 = vdwg.mxu0
    %v309 = vmax.f32 %v183, 0.0
    %v310 = vmax.f32 %v186, 0.0
    %v311 = vmax.f32 %v191, 0.0
    %v312 = vmax.f32 %v194, 0.0
    %v313 = vmax.f32 %v199, 0.0
    %v314 = vmax.f32 %v202, 0.0
    %v315 = vmax.f32 %v207, 0.0
    %v316 = vmax.f32 %v210, 0.0
    %v317 = vmax.f32 %v215, 0.0
    %v318 = vmax.f32 %v218, 0.0
    %v319 = vmax.f32 %v223, 0.0
    %v320 = vmax.f32 %v226, 0.0
    %v321 = vmax.f32 %v231, 0.0
    %v322 = vmax.f32 %v234, 0.0
    %v323 = vmax.f32 %v239, 0.0
    %v324 = vmax.f32 %v242, 0.0
    %v325 = vmax.f32 %v247, 0.0
    %v326 = vmax.f32 %v250, 0.0
    %v327 = vmax.f32 %v255, 0.0
    %v328 = vmax.f32 %v258, 0.0
    %v329 = vmax.f32 %v263, 0.0
    %v330 = vmax.f32 %v266, 0.0
    %v331 = vmax.f32 %v271, 0.0
    %v332 = vmax.f32 %v274, 0.0
    %v333 = vmax.f32 %v279, 0.0
    %v334 = vmax.f32 %v282, 0.0
    %v335 = vmax.f32 %v287, 0.0
    %v336 = vmax.f32 %v290, 0.0
    %v337 = vmax.f32 %v295, 0.0
    %v338 = vmax.f32 %v298, 0.0
    %v339 = vmax.f32 %v303, 0.0
    %v340 = vmax.f32 %v306, 0.0
    %v341 = vpack.c.bf16 %v310, %v309
    %v342 = vpack.c.bf16 %v312, %v311
    %v343 = vpack.c.bf16 %v314, %v313
    %v344 = vpack.c.bf16 %v316, %v315
    %v345 = vpack.c.bf16 %v318, %v317
    %v346 = vpack.c.bf16 %v320, %v319
    %v347 = vpack.c.bf16 %v322, %v321
    %v348 = vpack.c.bf16 %v324, %v323
    %v349 = vpack.c.bf16 %v326, %v325
    %v350 = vpack.c.bf16 %v328, %v327
    %v351 = vpack.c.bf16 %v330, %v329
    %v352 = vpack.c.bf16 %v332, %v331
    %v353 = vpack.c.bf16 %v334, %v333
    %v354 = vpack.c.bf16 %v336, %v335
    %v355 = vpack.c.bf16 %v338, %v337
    %v356 = vpack.c.bf16 %v340, %v339
    %v357 = vld [vmem:[%s3] sm:$0xf]
    %v358 = vld [vmem:[%s3 + $0x4] sm:$0xf]
    %v359 = vld [vmem:[%s3 + $0x8] sm:$0xf]
    %v360 = vld [vmem:[%s3 + $0xc] sm:$0xf]
    %v361 = vld [vmem:[%s3 + $0x10] sm:$0xf]
    %v362 = vld [vmem:[%s3 + $0x14] sm:$0xf]
    %v363 = vld [vmem:[%s3 + $0x18] sm:$0xf]
    %v364 = vld [vmem:[%s3 + $0x1c] sm:$0xf]
    %v365 = vld [vmem:[%s3 + $0x20] sm:$0xf]
    %v366 = vld [vmem:[%s3 + $0x24] sm:$0xf]
    %v367 = vld [vmem:[%s3 + $0x28] sm:$0xf]
    %v368 = vld [vmem:[%s3 + $0x2c] sm:$0xf]
    %v369 = vld [vmem:[%s3 + $0x30] sm:$0xf]
    %v370 = vld [vmem:[%s3 + $0x34] sm:$0xf]
    %v371 = vld [vmem:[%s3 + $0x38] sm:$0xf]
    %v372 = vld [vmem:[%s3 + $0x3c] sm:$0xf]
    %v373 = vld [vmem:[%s4] sm:$0x1]
    %v375 = vlaneseq
    %v376 = vshrl.u32 %v375, 7
    %v377 = vsub.s32 0, %v376
    %v378 = vrot.slane %v373, %v377
    %v396 = vunpack.c.l.b16 %v357
    %v397 = vunpack.c.l.b16 %v358
    %v398 = vunpack.c.l.b16 %v359
    %v399 = vunpack.c.l.b16 %v360
    %v400 = vunpack.c.l.b16 %v361
    %v401 = vunpack.c.l.b16 %v362
    %v402 = vunpack.c.l.b16 %v363
    %v403 = vunpack.c.l.b16 %v364
    %v404 = vunpack.c.l.b16 %v365
    %v405 = vunpack.c.l.b16 %v366
    %v406 = vunpack.c.l.b16 %v367
    %v407 = vunpack.c.l.b16 %v368
    %v408 = vunpack.c.l.b16 %v369
    %v409 = vunpack.c.l.b16 %v370
    %v410 = vunpack.c.l.b16 %v371
    %v411 = vunpack.c.l.b16 %v372
    %v412 = vpack.c.b16 %v397, %v396
    %v413 = vpack.c.b16 %v399, %v398
    %v414 = vpack.c.b16 %v401, %v400
    %v415 = vpack.c.b16 %v403, %v402
    %v416 = vpack.c.b16 %v405, %v404
    %v417 = vpack.c.b16 %v407, %v406
    %v418 = vpack.c.b16 %v409, %v408
    %v419 = vpack.c.b16 %v411, %v410
    %428 = vmatprep.subr.bf16.mxu0 0
    %429 = vmatpush1.bf16.msra.mxu0 %v412
    %430 = vmatprep.subr.bf16.mxu0 0
    %431 = vmatpush1.bf16.msra.mxu0 %v413
    %432 = vmatprep.subr.bf16.mxu0 0
    %433 = vmatpush1.bf16.msra.mxu0 %v414
    %434 = vmatprep.subr.bf16.mxu0 0
    %435 = vmatpush1.bf16.msra.mxu0 %v415
    %436 = vmatprep.subr.bf16.mxu0 0
    %437 = vmatpush1.bf16.msra.mxu0 %v416
    %438 = vmatprep.subr.bf16.mxu0 0
    %439 = vmatpush1.bf16.msra.mxu0 %v417
    %440 = vmatprep.subr.bf16.mxu0 0
    %441 = vmatpush1.bf16.msra.mxu0 %v418
    %442 = vmatprep.subr.bf16.mxu0 0
    %443 = vmatpush1.bf16.msra.mxu0 %v419
    %444 = vmatprep.subr.bf16.mxu0 0
    %445 = vmatpush1.bf16.msra.mxu0 0
    %446 = vmatprep.subr.bf16.mxu0 0
    %447 = vmatpush1.bf16.msra.mxu0 0
    %448 = vmatprep.subr.bf16.mxu0 0
    %449 = vmatpush1.bf16.msra.mxu0 0
    %450 = vmatprep.subr.bf16.mxu0 0
    %451 = vmatpush1.bf16.msra.mxu0 0
    %452 = vmatprep.subr.bf16.mxu0 0
    %453 = vmatpush1.bf16.msra.mxu0 0
    %454 = vmatprep.subr.bf16.mxu0 0
    %455 = vmatpush1.bf16.msra.mxu0 0
    %456 = vmatprep.subr.bf16.mxu0 0
    %457 = vmatpush1.bf16.msra.mxu0 0
    %458 = vmatprep.subr.bf16.mxu0 0
    %459 = vmatpush1.bf16.msra.mxu0 0
    %460 = vmatprep.mubr.bf16.mxu0 0
    %461 = vmatmul.mubr.bf16.gmra.mrb[0].mxu0 %v341
    %v462 = vpop.f32.mrb[0].mxu0
    %v463 = vadd.f32 %v378, %v462
    %v464 = vpop.f32.mrb[0].mxu0
    %v465 = vpop.f32.mrb[0].mxu0
    %v466 = vadd.f32 %v378, %v465
    %v467 = vpop.f32.mrb[0].mxu0
    %468 = vmatprep.mubr.bf16.mxu0 0
    %469 = vmatmul.mubr.bf16.gmra.mrb[0].mxu0 %v342
    %v470 = vpop.f32.mrb[0].mxu0
    %v471 = vadd.f32 %v378, %v470
    %v472 = vpop.f32.mrb[0].mxu0
    %v473 = vpop.f32.mrb[0].mxu0
    %v474 = vadd.f32 %v378, %v473
    %v475 = vpop.f32.mrb[0].mxu0
    %476 = vmatprep.mubr.bf16.mxu0 0
    %477 = vmatmul.mubr.bf16.gmra.mrb[0].mxu0 %v343
    %v478 = vpop.f32.mrb[0].mxu0
    %v479 = vadd.f32 %v378, %v478
    %v480 = vpop.f32.mrb[0].mxu0
    %v481 = vpop.f32.mrb[0].mxu0
    %v482 = vadd.f32 %v378, %v481
    %v483 = vpop.f32.mrb[0].mxu0
    %484 = vmatprep.mubr.bf16.mxu0 0
    %485 = vmatmul.mubr.bf16.gmra.mrb[0].mxu0 %v344
    %v486 = vpop.f32.mrb[0].mxu0
    %v487 = vadd.f32 %v378, %v486
    %v488 = vpop.f32.mrb[0].mxu0
    %v489 = vpop.f32.mrb[0].mxu0
    %v490 = vadd.f32 %v378, %v489
    %v491 = vpop.f32.mrb[0].mxu0
    %492 = vmatprep.mubr.bf16.mxu0 0
    %493 = vmatmul.mubr.bf16.gmra.mrb[0].mxu0 %v345
    %v494 = vpop.f32.mrb[0].mxu0
    %v495 = vadd.f32 %v378, %v494
    %v496 = vpop.f32.mrb[0].mxu0
    %v497 = vpop.f32.mrb[0].mxu0
    %v498 = vadd.f32 %v378, %v497
    %v499 = vpop.f32.mrb[0].mxu0
    %500 = vmatprep.mubr.bf16.mxu0 0
    %501 = vmatmul.mubr.bf16.gmra.mrb[0].mxu0 %v346
    %v502 = vpop.f32.mrb[0].mxu0
    %v503 = vadd.f32 %v378, %v502
    %v504 = vpop.f32.mrb[0].mxu0
    %v505 = vpop.f32.mrb[0].mxu0
    %v506 = vadd.f32 %v378, %v505
    %v507 = vpop.f32.mrb[0].mxu0
    %508 = vmatprep.mubr.bf16.mxu0 0
    %509 = vmatmul.mubr.bf16.gmra.mrb[0].mxu0 %v347
    %v510 = vpop.f32.mrb[0].mxu0
    %v511 = vadd.f32 %v378, %v510
    %v512 = vpop.f32.mrb[0].mxu0
    %v513 = vpop.f32.mrb[0].mxu0
    %v514 = vadd.f32 %v378, %v513
    %v515 = vpop.f32.mrb[0].mxu0
    %516 = vmatprep.mubr.bf16.mxu0 0
    %517 = vmatmul.mubr.bf16.gmra.mrb[0].mxu0 %v348
    %v518 = vpop.f32.mrb[0].mxu0
    %v519 = vadd.f32 %v378, %v518
    %v520 = vpop.f32.mrb[0].mxu0
    %v521 = vpop.f32.mrb[0].mxu0
    %v522 = vadd.f32 %v378, %v521
    %v523 = vpop.f32.mrb[0].mxu0
    %524 = vmatprep.mubr.bf16.mxu0 0
    %525 = vmatmul.mubr.bf16.gmra.mrb[0].mxu0 %v349
    %v526 = vpop.f32.mrb[0].mxu0
    %v527 = vadd.f32 %v378, %v526
    %v528 = vpop.f32.mrb[0].mxu0
    %v529 = vpop.f32.mrb[0].mxu0
    %v530 = vadd.f32 %v378, %v529
    %v531 = vpop.f32.mrb[0].mxu0
    %532 = vmatprep.mubr.bf16.mxu0 0
    %533 = vmatmul.mubr.bf16.gmra.mrb[0].mxu0 %v350
    %v534 = vpop.f32.mrb[0].mxu0
    %v535 = vadd.f32 %v378, %v534
    %v536 = vpop.f32.mrb[0].mxu0
    %v537 = vpop.f32.mrb[0].mxu0
    %v538 = vadd.f32 %v378, %v537
    %v539 = vpop.f32.mrb[0].mxu0
    %540 = vmatprep.mubr.bf16.mxu0 0
    %541 = vmatmul.mubr.bf16.gmra.mrb[0].mxu0 %v351
    %v542 = vpop.f32.mrb[0].mxu0
    %v543 = vadd.f32 %v378, %v542
    %v544 = vpop.f32.mrb[0].mxu0
    %v545 = vpop.f32.mrb[0].mxu0
    %v546 = vadd.f32 %v378, %v545
    %v547 = vpop.f32.mrb[0].mxu0
    %548 = vmatprep.mubr.bf16.mxu0 0
    %549 = vmatmul.mubr.bf16.gmra.mrb[0].mxu0 %v352
    %v550 = vpop.f32.mrb[0].mxu0
    %v551 = vadd.f32 %v378, %v550
    %v552 = vpop.f32.mrb[0].mxu0
    %v553 = vpop.f32.mrb[0].mxu0
    %v554 = vadd.f32 %v378, %v553
    %v555 = vpop.f32.mrb[0].mxu0
    %556 = vmatprep.mubr.bf16.mxu0 0
    %557 = vmatmul.mubr.bf16.gmra.mrb[0].mxu0 %v353
    %v558 = vpop.f32.mrb[0].mxu0
    %v559 = vadd.f32 %v378, %v558
    %v560 = vpop.f32.mrb[0].mxu0
    %v561 = vpop.f32.mrb[0].mxu0
    %v562 = vadd.f32 %v378, %v561
    %v563 = vpop.f32.mrb[0].mxu0
    %564 = vmatprep.mubr.bf16.mxu0 0
    %565 = vmatmul.mubr.bf16.gmra.mrb[0].mxu0 %v354
    %v566 = vpop.f32.mrb[0].mxu0
    %v567 = vadd.f32 %v378, %v566
    %v568 = vpop.f32.mrb[0].mxu0
    %v569 = vpop.f32.mrb[0].mxu0
    %v570 = vadd.f32 %v378, %v569
    %v571 = vpop.f32.mrb[0].mxu0
    %572 = vmatprep.mubr.bf16.mxu0 0
    %573 = vmatmul.mubr.bf16.gmra.mrb[0].mxu0 %v355
    %v574 = vpop.f32.mrb[0].mxu0
    %v575 = vadd.f32 %v378, %v574
    %v576 = vpop.f32.mrb[0].mxu0
    %v577 = vpop.f32.mrb[0].mxu0
    %v578 = vadd.f32 %v378, %v577
    %v579 = vpop.f32.mrb[0].mxu0
    %580 = vmatprep.mubr.bf16.mxu0 0
    %581 = vmatmul.mubr.bf16.gmra.mrb[0].mxu0 %v356
    %v582 = vpop.f32.mrb[0].mxu0
    %v583 = vadd.f32 %v378, %v582
    %v584 = vpop.f32.mrb[0].mxu0
    %v585 = vpop.f32.mrb[0].mxu0
    %v586 = vadd.f32 %v378, %v585
    %v587 = vpop.f32.mrb[0].mxu0
    %588 = vdwg.mxu0
    %v589 = vmax.f32 %v463, 0.0
    %v590 = vmax.f32 %v466, 0.0
    %v591 = vmax.f32 %v471, 0.0
    %v592 = vmax.f32 %v474, 0.0
    %v593 = vmax.f32 %v479, 0.0
    %v594 = vmax.f32 %v482, 0.0
    %v595 = vmax.f32 %v487, 0.0
    %v596 = vmax.f32 %v490, 0.0
    %v597 = vmax.f32 %v495, 0.0
    %v598 = vmax.f32 %v498, 0.0
    %v599 = vmax.f32 %v503, 0.0
    %v600 = vmax.f32 %v506, 0.0
    %v601 = vmax.f32 %v511, 0.0
    %v602 = vmax.f32 %v514, 0.0
    %v603 = vmax.f32 %v519, 0.0
    %v604 = vmax.f32 %v522, 0.0
    %v605 = vmax.f32 %v527, 0.0
    %v606 = vmax.f32 %v530, 0.0
    %v607 = vmax.f32 %v535, 0.0
    %v608 = vmax.f32 %v538, 0.0
    %v609 = vmax.f32 %v543, 0.0
    %v610 = vmax.f32 %v546, 0.0
    %v611 = vmax.f32 %v551, 0.0
    %v612 = vmax.f32 %v554, 0.0
    %v613 = vmax.f32 %v559, 0.0
    %v614 = vmax.f32 %v562, 0.0
    %v615 = vmax.f32 %v567, 0.0
    %v616 = vmax.f32 %v570, 0.0
    %v617 = vmax.f32 %v575, 0.0
    %v618 = vmax.f32 %v578, 0.0
    %v619 = vmax.f32 %v583, 0.0
    %v620 = vmax.f32 %v586, 0.0
    %v621 = vpack.c.bf16 %v590, %v589
    %v622 = vpack.c.bf16 %v592, %v591
    %v623 = vpack.c.bf16 %v594, %v593
    %v624 = vpack.c.bf16 %v596, %v595
    %v625 = vpack.c.bf16 %v598, %v597
    %v626 = vpack.c.bf16 %v600, %v599
    %v627 = vpack.c.bf16 %v602, %v601
    %v628 = vpack.c.bf16 %v604, %v603
    %v629 = vpack.c.bf16 %v606, %v605
    %v630 = vpack.c.bf16 %v608, %v607
    %v631 = vpack.c.bf16 %v610, %v609
    %v632 = vpack.c.bf16 %v612, %v611
    %v633 = vpack.c.bf16 %v614, %v613
    %v634 = vpack.c.bf16 %v616, %v615
    %v635 = vpack.c.bf16 %v618, %v617
    %v636 = vpack.c.bf16 %v620, %v619
    %v637 = vld [vmem:[%s5] sm:$0xf]
    %v638 = vld [vmem:[%s5 + $0x4] sm:$0xf]
    %v639 = vld [vmem:[%s5 + $0x8] sm:$0xf]
    %v640 = vld [vmem:[%s5 + $0xc] sm:$0xf]
    %v641 = vld [vmem:[%s5 + $0x10] sm:$0xf]
    %v642 = vld [vmem:[%s5 + $0x14] sm:$0xf]
    %v643 = vld [vmem:[%s5 + $0x18] sm:$0xf]
    %v644 = vld [vmem:[%s5 + $0x1c] sm:$0xf]
    %v645 = vld [vmem:[%s5 + $0x20] sm:$0xf]
    %v646 = vld [vmem:[%s5 + $0x24] sm:$0xf]
    %v647 = vld [vmem:[%s5 + $0x28] sm:$0xf]
    %v648 = vld [vmem:[%s5 + $0x2c] sm:$0xf]
    %v649 = vld [vmem:[%s5 + $0x30] sm:$0xf]
    %v650 = vld [vmem:[%s5 + $0x34] sm:$0xf]
    %v651 = vld [vmem:[%s5 + $0x38] sm:$0xf]
    %v652 = vld [vmem:[%s5 + $0x3c] sm:$0xf]
    %v653 = vld [vmem:[%s6] sm:$0x1]
    %v655 = vlaneseq
    %v656 = vshrl.u32 %v655, 7
    %v657 = vsub.s32 0, %v656
    %v658 = vrot.slane %v653, %v657
    %v676 = vunpack.c.l.b16 %v637
    %v677 = vunpack.c.l.b16 %v638
    %v678 = vunpack.c.l.b16 %v639
    %v679 = vunpack.c.l.b16 %v640
    %v680 = vunpack.c.l.b16 %v641
    %v681 = vunpack.c.l.b16 %v642
    %v682 = vunpack.c.l.b16 %v643
    %v683 = vunpack.c.l.b16 %v644
    %v684 = vunpack.c.l.b16 %v645
    %v685 = vunpack.c.l.b16 %v646
    %v686 = vunpack.c.l.b16 %v647
    %v687 = vunpack.c.l.b16 %v648
    %v688 = vunpack.c.l.b16 %v649
    %v689 = vunpack.c.l.b16 %v650
    %v690 = vunpack.c.l.b16 %v651
    %v691 = vunpack.c.l.b16 %v652
    %v692 = vpack.c.b16 %v677, %v676
    %v693 = vpack.c.b16 %v679, %v678
    %v694 = vpack.c.b16 %v681, %v680
    %v695 = vpack.c.b16 %v683, %v682
    %v696 = vpack.c.b16 %v685, %v684
    %v697 = vpack.c.b16 %v687, %v686
    %v698 = vpack.c.b16 %v689, %v688
    %v699 = vpack.c.b16 %v691, %v690
    %708 = vmatprep.subr.bf16.mxu0 0
    %709 = vmatpush1.bf16.msra.mxu0 %v692
    %710 = vmatprep.subr.bf16.mxu0 0
    %711 = vmatpush1.bf16.msra.mxu0 %v693
    %712 = vmatprep.subr.bf16.mxu0 0
    %713 = vmatpush1.bf16.msra.mxu0 %v694
    %714 = vmatprep.subr.bf16.mxu0 0
    %715 = vmatpush1.bf16.msra.mxu0 %v695
    %716 = vmatprep.subr.bf16.mxu0 0
    %717 = vmatpush1.bf16.msra.mxu0 %v696
    %718 = vmatprep.subr.bf16.mxu0 0
    %719 = vmatpush1.bf16.msra.mxu0 %v697
    %720 = vmatprep.subr.bf16.mxu0 0
    %721 = vmatpush1.bf16.msra.mxu0 %v698
    %722 = vmatprep.subr.bf16.mxu0 0
    %723 = vmatpush1.bf16.msra.mxu0 %v699
    %724 = vmatprep.subr.bf16.mxu0 0
    %725 = vmatpush1.bf16.msra.mxu0 0
    %726 = vmatprep.subr.bf16.mxu0 0
    %727 = vmatpush1.bf16.msra.mxu0 0
    %728 = vmatprep.subr.bf16.mxu0 0
    %729 = vmatpush1.bf16.msra.mxu0 0
    %730 = vmatprep.subr.bf16.mxu0 0
    %731 = vmatpush1.bf16.msra.mxu0 0
    %732 = vmatprep.subr.bf16.mxu0 0
    %733 = vmatpush1.bf16.msra.mxu0 0
    %734 = vmatprep.subr.bf16.mxu0 0
    %735 = vmatpush1.bf16.msra.mxu0 0
    %736 = vmatprep.subr.bf16.mxu0 0
    %737 = vmatpush1.bf16.msra.mxu0 0
    %738 = vmatprep.subr.bf16.mxu0 0
    %739 = vmatpush1.bf16.msra.mxu0 0
    %740 = vmatprep.mubr.bf16.mxu0 0
    %741 = vmatmul.mubr.bf16.gmra.mrb[0].mxu0 %v621
    %v742 = vpop.f32.mrb[0].mxu0
    %v743 = vadd.f32 %v658, %v742
    %v744 = vpop.f32.mrb[0].mxu0
    %v745 = vpop.f32.mrb[0].mxu0
    %v746 = vadd.f32 %v658, %v745
    %v747 = vpop.f32.mrb[0].mxu0
    %748 = vmatprep.mubr.bf16.mxu0 0
    %749 = vmatmul.mubr.bf16.gmra.mrb[0].mxu0 %v622
    %v750 = vpop.f32.mrb[0].mxu0
    %v751 = vadd.f32 %v658, %v750
    %v752 = vpop.f32.mrb[0].mxu0
    %v753 = vpop.f32.mrb[0].mxu0
    %v754 = vadd.f32 %v658, %v753
    %v755 = vpop.f32.mrb[0].mxu0
    %756 = vmatprep.mubr.bf16.mxu0 0
    %757 = vmatmul.mubr.bf16.gmra.mrb[0].mxu0 %v623
    %v758 = vpop.f32.mrb[0].mxu0
    %v759 = vadd.f32 %v658, %v758
    %v760 = vpop.f32.mrb[0].mxu0
    %v761 = vpop.f32.mrb[0].mxu0
    %v762 = vadd.f32 %v658, %v761
    %v763 = vpop.f32.mrb[0].mxu0
    %764 = vmatprep.mubr.bf16.mxu0 0
    %765 = vmatmul.mubr.bf16.gmra.mrb[0].mxu0 %v624
    %v766 = vpop.f32.mrb[0].mxu0
    %v767 = vadd.f32 %v658, %v766
    %v768 = vpop.f32.mrb[0].mxu0
    %v769 = vpop.f32.mrb[0].mxu0
    %v770 = vadd.f32 %v658, %v769
    %v771 = vpop.f32.mrb[0].mxu0
    %772 = vmatprep.mubr.bf16.mxu0 0
    %773 = vmatmul.mubr.bf16.gmra.mrb[0].mxu0 %v625
    %v774 = vpop.f32.mrb[0].mxu0
    %v775 = vadd.f32 %v658, %v774
    %v776 = vpop.f32.mrb[0].mxu0
    %v777 = vpop.f32.mrb[0].mxu0
    %v778 = vadd.f32 %v658, %v777
    %v779 = vpop.f32.mrb[0].mxu0
    %780 = vmatprep.mubr.bf16.mxu0 0
    %781 = vmatmul.mubr.bf16.gmra.mrb[0].mxu0 %v626
    %v782 = vpop.f32.mrb[0].mxu0
    %v783 = vadd.f32 %v658, %v782
    %v784 = vpop.f32.mrb[0].mxu0
    %v785 = vpop.f32.mrb[0].mxu0
    %v786 = vadd.f32 %v658, %v785
    %v787 = vpop.f32.mrb[0].mxu0
    %788 = vmatprep.mubr.bf16.mxu0 0
    %789 = vmatmul.mubr.bf16.gmra.mrb[0].mxu0 %v627
    %v790 = vpop.f32.mrb[0].mxu0
    %v791 = vadd.f32 %v658, %v790
    %v792 = vpop.f32.mrb[0].mxu0
    %v793 = vpop.f32.mrb[0].mxu0
    %v794 = vadd.f32 %v658, %v793
    %v795 = vpop.f32.mrb[0].mxu0
    %796 = vmatprep.mubr.bf16.mxu0 0
    %797 = vmatmul.mubr.bf16.gmra.mrb[0].mxu0 %v628
    %v798 = vpop.f32.mrb[0].mxu0
    %v799 = vadd.f32 %v658, %v798
    %v800 = vpop.f32.mrb[0].mxu0
    %v801 = vpop.f32.mrb[0].mxu0
    %v802 = vadd.f32 %v658, %v801
    %v803 = vpop.f32.mrb[0].mxu0
    %804 = vmatprep.mubr.bf16.mxu0 0
    %805 = vmatmul.mubr.bf16.gmra.mrb[0].mxu0 %v629
    %v806 = vpop.f32.mrb[0].mxu0
    %v807 = vadd.f32 %v658, %v806
    %v808 = vpop.f32.mrb[0].mxu0
    %v809 = vpop.f32.mrb[0].mxu0
    %v810 = vadd.f32 %v658, %v809
    %v811 = vpop.f32.mrb[0].mxu0
    %812 = vmatprep.mubr.bf16.mxu0 0
    %813 = vmatmul.mubr.bf16.gmra.mrb[0].mxu0 %v630
    %v814 = vpop.f32.mrb[0].mxu0
    %v815 = vadd.f32 %v658, %v814
    %v816 = vpop.f32.mrb[0].mxu0
    %v817 = vpop.f32.mrb[0].mxu0
    %v818 = vadd.f32 %v658, %v817
    %v819 = vpop.f32.mrb[0].mxu0
    %820 = vmatprep.mubr.bf16.mxu0 0
    %821 = vmatmul.mubr.bf16.gmra.mrb[0].mxu0 %v631
    %v822 = vpop.f32.mrb[0].mxu0
    %v823 = vadd.f32 %v658, %v822
    %v824 = vpop.f32.mrb[0].mxu0
    %v825 = vpop.f32.mrb[0].mxu0
    %v826 = vadd.f32 %v658, %v825
    %v827 = vpop.f32.mrb[0].mxu0
    %828 = vmatprep.mubr.bf16.mxu0 0
    %829 = vmatmul.mubr.bf16.gmra.mrb[0].mxu0 %v632
    %v830 = vpop.f32.mrb[0].mxu0
    %v831 = vadd.f32 %v658, %v830
    %v832 = vpop.f32.mrb[0].mxu0
    %v833 = vpop.f32.mrb[0].mxu0
    %v834 = vadd.f32 %v658, %v833
    %v835 = vpop.f32.mrb[0].mxu0
    %836 = vmatprep.mubr.bf16.mxu0 0
    %837 = vmatmul.mubr.bf16.gmra.mrb[0].mxu0 %v633
    %v838 = vpop.f32.mrb[0].mxu0
    %v839 = vadd.f32 %v658, %v838
    %v840 = vpop.f32.mrb[0].mxu0
    %v841 = vpop.f32.mrb[0].mxu0
    %v842 = vadd.f32 %v658, %v841
    %v843 = vpop.f32.mrb[0].mxu0
    %844 = vmatprep.mubr.bf16.mxu0 0
    %845 = vmatmul.mubr.bf16.gmra.mrb[0].mxu0 %v634
    %v846 = vpop.f32.mrb[0].mxu0
    %v847 = vadd.f32 %v658, %v846
    %v848 = vpop.f32.mrb[0].mxu0
    %v849 = vpop.f32.mrb[0].mxu0
    %v850 = vadd.f32 %v658, %v849
    %v851 = vpop.f32.mrb[0].mxu0
    %852 = vmatprep.mubr.bf16.mxu0 0
    %853 = vmatmul.mubr.bf16.gmra.mrb[0].mxu0 %v635
    %v854 = vpop.f32.mrb[0].mxu0
    %v855 = vadd.f32 %v658, %v854
    %v856 = vpop.f32.mrb[0].mxu0
    %v857 = vpop.f32.mrb[0].mxu0
    %v858 = vadd.f32 %v658, %v857
    %v859 = vpop.f32.mrb[0].mxu0
    %860 = vmatprep.mubr.bf16.mxu0 0
    %861 = vmatmul.mubr.bf16.gmra.mrb[0].mxu0 %v636
    %v862 = vpop.f32.mrb[0].mxu0
    %v863 = vadd.f32 %v658, %v862
    %v864 = vpop.f32.mrb[0].mxu0
    %v865 = vpop.f32.mrb[0].mxu0
    %v866 = vadd.f32 %v658, %v865
    %v867 = vpop.f32.mrb[0].mxu0
    %868 = vdwg.mxu0
    %v869 = vmax.f32 %v743, 0.0
    %v870 = vmax.f32 %v746, 0.0
    %v871 = vmax.f32 %v751, 0.0
    %v872 = vmax.f32 %v754, 0.0
    %v873 = vmax.f32 %v759, 0.0
    %v874 = vmax.f32 %v762, 0.0
    %v875 = vmax.f32 %v767, 0.0
    %v876 = vmax.f32 %v770, 0.0
    %v877 = vmax.f32 %v775, 0.0
    %v878 = vmax.f32 %v778, 0.0
    %v879 = vmax.f32 %v783, 0.0
    %v880 = vmax.f32 %v786, 0.0
    %v881 = vmax.f32 %v791, 0.0
    %v882 = vmax.f32 %v794, 0.0
    %v883 = vmax.f32 %v799, 0.0
    %v884 = vmax.f32 %v802, 0.0
    %v885 = vmax.f32 %v807, 0.0
    %v886 = vmax.f32 %v810, 0.0
    %v887 = vmax.f32 %v815, 0.0
    %v888 = vmax.f32 %v818, 0.0
    %v889 = vmax.f32 %v823, 0.0
    %v890 = vmax.f32 %v826, 0.0
    %v891 = vmax.f32 %v831, 0.0
    %v892 = vmax.f32 %v834, 0.0
    %v893 = vmax.f32 %v839, 0.0
    %v894 = vmax.f32 %v842, 0.0
    %v895 = vmax.f32 %v847, 0.0
    %v896 = vmax.f32 %v850, 0.0
    %v897 = vmax.f32 %v855, 0.0
    %v898 = vmax.f32 %v858, 0.0
    %v899 = vmax.f32 %v863, 0.0
    %v900 = vmax.f32 %v866, 0.0
    %v901 = vpack.c.bf16 %v870, %v869
    %v902 = vpack.c.bf16 %v872, %v871
    %v903 = vpack.c.bf16 %v874, %v873
    %v904 = vpack.c.bf16 %v876, %v875
    %v905 = vpack.c.bf16 %v878, %v877
    %v906 = vpack.c.bf16 %v880, %v879
    %v907 = vpack.c.bf16 %v882, %v881
    %v908 = vpack.c.bf16 %v884, %v883
    %v909 = vpack.c.bf16 %v886, %v885
    %v910 = vpack.c.bf16 %v888, %v887
    %v911 = vpack.c.bf16 %v890, %v889
    %v912 = vpack.c.bf16 %v892, %v891
    %v913 = vpack.c.bf16 %v894, %v893
    %v914 = vpack.c.bf16 %v896, %v895
    %v915 = vpack.c.bf16 %v898, %v897
    %v916 = vpack.c.bf16 %v900, %v899
    %917 = vmatprep.subr.bf16.mxu0 0
    %918 = vmatpush1.bf16.msra.mxu0 %v692
    %919 = vmatprep.subr.bf16.mxu0 0
    %920 = vmatpush1.bf16.msra.mxu0 %v693
    %921 = vmatprep.subr.bf16.mxu0 0
    %922 = vmatpush1.bf16.msra.mxu0 %v694
    %923 = vmatprep.subr.bf16.mxu0 0
    %924 = vmatpush1.bf16.msra.mxu0 %v695
    %925 = vmatprep.subr.bf16.mxu0 0
    %926 = vmatpush1.bf16.msra.mxu0 %v696
    %927 = vmatprep.subr.bf16.mxu0 0
    %928 = vmatpush1.bf16.msra.mxu0 %v697
    %929 = vmatprep.subr.bf16.mxu0 0
    %930 = vmatpush1.bf16.msra.mxu0 %v698
    %931 = vmatprep.subr.bf16.mxu0 0
    %932 = vmatpush1.bf16.msra.mxu0 %v699
    %933 = vmatprep.subr.bf16.mxu0 0
    %934 = vmatpush1.bf16.msra.mxu0 0
    %935 = vmatprep.subr.bf16.mxu0 0
    %936 = vmatpush1.bf16.msra.mxu0 0
    %937 = vmatprep.subr.bf16.mxu0 0
    %938 = vmatpush1.bf16.msra.mxu0 0
    %939 = vmatprep.subr.bf16.mxu0 0
    %940 = vmatpush1.bf16.msra.mxu0 0
    %941 = vmatprep.subr.bf16.mxu0 0
    %942 = vmatpush1.bf16.msra.mxu0 0
    %943 = vmatprep.subr.bf16.mxu0 0
    %944 = vmatpush1.bf16.msra.mxu0 0
    %945 = vmatprep.subr.bf16.mxu0 0
    %946 = vmatpush1.bf16.msra.mxu0 0
    %947 = vmatprep.subr.bf16.mxu0 0
    %948 = vmatpush1.bf16.msra.mxu0 0
    %949 = vmatprep.mubr.bf16.mxu0 0
    %950 = vmatmul.mubr.bf16.gmra.mrb[0].mxu0 %v901
    %v951 = vpop.f32.mrb[0].mxu0
    %v952 = vadd.f32 %v658, %v951
    %v953 = vpop.f32.mrb[0].mxu0
    %v954 = vpop.f32.mrb[0].mxu0
    %v955 = vadd.f32 %v658, %v954
    %v956 = vpop.f32.mrb[0].mxu0
    %957 = vmatprep.mubr.bf16.mxu0 0
    %958 = vmatmul.mubr.bf16.gmra.mrb[0].mxu0 %v902
    %v959 = vpop.f32.mrb[0].mxu0
    %v960 = vadd.f32 %v658, %v959
    %v961 = vpop.f32.mrb[0].mxu0
    %v962 = vpop.f32.mrb[0].mxu0
    %v963 = vadd.f32 %v658, %v962
    %v964 = vpop.f32.mrb[0].mxu0
    %965 = vmatprep.mubr.bf16.mxu0 0
    %966 = vmatmul.mubr.bf16.gmra.mrb[0].mxu0 %v903
    %v967 = vpop.f32.mrb[0].mxu0
    %v968 = vadd.f32 %v658, %v967
    %v969 = vpop.f32.mrb[0].mxu0
    %v970 = vpop.f32.mrb[0].mxu0
    %v971 = vadd.f32 %v658, %v970
    %v972 = vpop.f32.mrb[0].mxu0
    %973 = vmatprep.mubr.bf16.mxu0 0
    %974 = vmatmul.mubr.bf16.gmra.mrb[0].mxu0 %v904
    %v975 = vpop.f32.mrb[0].mxu0
    %v976 = vadd.f32 %v658, %v975
    %v977 = vpop.f32.mrb[0].mxu0
    %v978 = vpop.f32.mrb[0].mxu0
    %v979 = vadd.f32 %v658, %v978
    %v980 = vpop.f32.mrb[0].mxu0
    %981 = vmatprep.mubr.bf16.mxu0 0
    %982 = vmatmul.mubr.bf16.gmra.mrb[0].mxu0 %v905
    %v983 = vpop.f32.mrb[0].mxu0
    %v984 = vadd.f32 %v658, %v983
    %v985 = vpop.f32.mrb[0].mxu0
    %v986 = vpop.f32.mrb[0].mxu0
    %v987 = vadd.f32 %v658, %v986
    %v988 = vpop.f32.mrb[0].mxu0
    %989 = vmatprep.mubr.bf16.mxu0 0
    %990 = vmatmul.mubr.bf16.gmra.mrb[0].mxu0 %v906
    %v991 = vpop.f32.mrb[0].mxu0
    %v992 = vadd.f32 %v658, %v991
    %v993 = vpop.f32.mrb[0].mxu0
    %v994 = vpop.f32.mrb[0].mxu0
    %v995 = vadd.f32 %v658, %v994
    %v996 = vpop.f32.mrb[0].mxu0
    %997 = vmatprep.mubr.bf16.mxu0 0
    %998 = vmatmul.mubr.bf16.gmra.mrb[0].mxu0 %v907
    %v999 = vpop.f32.mrb[0].mxu0
    %v1000 = vadd.f32 %v658, %v999
    %v1001 = vpop.f32.mrb[0].mxu0
    %v1002 = vpop.f32.mrb[0].mxu0
    %v1003 = vadd.f32 %v658, %v1002
    %v1004 = vpop.f32.mrb[0].mxu0
    %1005 = vmatprep.mubr.bf16.mxu0 0
    %1006 = vmatmul.mubr.bf16.gmra.mrb[0].mxu0 %v908
    %v1007 = vpop.f32.mrb[0].mxu0
    %v1008 = vadd.f32 %v658, %v1007
    %v1009 = vpop.f32.mrb[0].mxu0
    %v1010 = vpop.f32.mrb[0].mxu0
    %v1011 = vadd.f32 %v658, %v1010
    %v1012 = vpop.f32.mrb[0].mxu0
    %1013 = vmatprep.mubr.bf16.mxu0 0
    %1014 = vmatmul.mubr.bf16.gmra.mrb[0].mxu0 %v909
    %v1015 = vpop.f32.mrb[0].mxu0
    %v1016 = vadd.f32 %v658, %v1015
    %v1017 = vpop.f32.mrb[0].mxu0
    %v1018 = vpop.f32.mrb[0].mxu0
    %v1019 = vadd.f32 %v658, %v1018
    %v1020 = vpop.f32.mrb[0].mxu0
    %1021 = vmatprep.mubr.bf16.mxu0 0
    %1022 = vmatmul.mubr.bf16.gmra.mrb[0].mxu0 %v910
    %v1023 = vpop.f32.mrb[0].mxu0
    %v1024 = vadd.f32 %v658, %v1023
    %v1025 = vpop.f32.mrb[0].mxu0
    %v1026 = vpop.f32.mrb[0].mxu0
    %v1027 = vadd.f32 %v658, %v1026
    %v1028 = vpop.f32.mrb[0].mxu0
    %1029 = vmatprep.mubr.bf16.mxu0 0
    %1030 = vmatmul.mubr.bf16.gmra.mrb[0].mxu0 %v911
    %v1031 = vpop.f32.mrb[0].mxu0
    %v1032 = vadd.f32 %v658, %v1031
    %v1033 = vpop.f32.mrb[0].mxu0
    %v1034 = vpop.f32.mrb[0].mxu0
    %v1035 = vadd.f32 %v658, %v1034
    %v1036 = vpop.f32.mrb[0].mxu0
    %1037 = vmatprep.mubr.bf16.mxu0 0
    %1038 = vmatmul.mubr.bf16.gmra.mrb[0].mxu0 %v912
    %v1039 = vpop.f32.mrb[0].mxu0
    %v1040 = vadd.f32 %v658, %v1039
    %v1041 = vpop.f32.mrb[0].mxu0
    %v1042 = vpop.f32.mrb[0].mxu0
    %v1043 = vadd.f32 %v658, %v1042
    %v1044 = vpop.f32.mrb[0].mxu0
    %1045 = vmatprep.mubr.bf16.mxu0 0
    %1046 = vmatmul.mubr.bf16.gmra.mrb[0].mxu0 %v913
    %v1047 = vpop.f32.mrb[0].mxu0
    %v1048 = vadd.f32 %v658, %v1047
    %v1049 = vpop.f32.mrb[0].mxu0
    %v1050 = vpop.f32.mrb[0].mxu0
    %v1051 = vadd.f32 %v658, %v1050
    %v1052 = vpop.f32.mrb[0].mxu0
    %1053 = vmatprep.mubr.bf16.mxu0 0
    %1054 = vmatmul.mubr.bf16.gmra.mrb[0].mxu0 %v914
    %v1055 = vpop.f32.mrb[0].mxu0
    %v1056 = vadd.f32 %v658, %v1055
    %v1057 = vpop.f32.mrb[0].mxu0
    %v1058 = vpop.f32.mrb[0].mxu0
    %v1059 = vadd.f32 %v658, %v1058
    %v1060 = vpop.f32.mrb[0].mxu0
    %1061 = vmatprep.mubr.bf16.mxu0 0
    %1062 = vmatmul.mubr.bf16.gmra.mrb[0].mxu0 %v915
    %v1063 = vpop.f32.mrb[0].mxu0
    %v1064 = vadd.f32 %v658, %v1063
    %v1065 = vpop.f32.mrb[0].mxu0
    %v1066 = vpop.f32.mrb[0].mxu0
    %v1067 = vadd.f32 %v658, %v1066
    %v1068 = vpop.f32.mrb[0].mxu0
    %1069 = vmatprep.mubr.bf16.mxu0 0
    %1070 = vmatmul.mubr.bf16.gmra.mrb[0].mxu0 %v916
    %v1071 = vpop.f32.mrb[0].mxu0
    %v1072 = vadd.f32 %v658, %v1071
    %v1073 = vpop.f32.mrb[0].mxu0
    %v1074 = vpop.f32.mrb[0].mxu0
    %v1075 = vadd.f32 %v658, %v1074
    %v1076 = vpop.f32.mrb[0].mxu0
    %1077 = vdwg.mxu0
    %1078 = vst [vmem:[#allocation2] sm:$0xff] %v952
    %1079 = vst [vmem:[#allocation2 + $0x8] sm:$0xff] %v955
    %1080 = vst [vmem:[#allocation2 + $0x10] sm:$0xff] %v960
    %1081 = vst [vmem:[#allocation2 + $0x18] sm:$0xff] %v963
    %1082 = vst [vmem:[#allocation2 + $0x20] sm:$0xff] %v968
    %1083 = vst [vmem:[#allocation2 + $0x28] sm:$0xff] %v971
    %1084 = vst [vmem:[#allocation2 + $0x30] sm:$0xff] %v976
    %1085 = vst [vmem:[#allocation2 + $0x38] sm:$0xff] %v979
    %1086 = vst [vmem:[#allocation2 + $0x40] sm:$0xff] %v984
    %1087 = vst [vmem:[#allocation2 + $0x48] sm:$0xff] %v987
    %1088 = vst [vmem:[#allocation2 + $0x50] sm:$0xff] %v992
    %1089 = vst [vmem:[#allocation2 + $0x58] sm:$0xff] %v995
    %1090 = vst [vmem:[#allocation2 + $0x60] sm:$0xff] %v1000
    %1091 = vst [vmem:[#allocation2 + $0x68] sm:$0xff] %v1003
    %1092 = vst [vmem:[#allocation2 + $0x70] sm:$0xff] %v1008
    %1093 = vst [vmem:[#allocation2 + $0x78] sm:$0xff] %v1011
    %1094 = vst [vmem:[#allocation2 + $0x80] sm:$0xff] %v1016
    %1095 = vst [vmem:[#allocation2 + $0x88] sm:$0xff] %v1019
    %1096 = vst [vmem:[#allocation2 + $0x90] sm:$0xff] %v1024
    %1097 = vst [vmem:[#allocation2 + $0x98] sm:$0xff] %v1027
    %1098 = vst [vmem:[#allocation2 + $0xa0] sm:$0xff] %v1032
    %1099 = vst [vmem:[#allocation2 + $0xa8] sm:$0xff] %v1035
    %1100 = vst [vmem:[#allocation2 + $0xb0] sm:$0xff] %v1040
    %1101 = vst [vmem:[#allocation2 + $0xb8] sm:$0xff] %v1043
    %1102 = vst [vmem:[#allocation2 + $0xc0] sm:$0xff] %v1048
    %1103 = vst [vmem:[#allocation2 + $0xc8] sm:$0xff] %v1051
    %1104 = vst [vmem:[#allocation2 + $0xd0] sm:$0xff] %v1056
    %1105 = vst [vmem:[#allocation2 + $0xd8] sm:$0xff] %v1059
    %1106 = vst [vmem:[#allocation2 + $0xe0] sm:$0xff] %v1064
    %1107 = vst [vmem:[#allocation2 + $0xe8] sm:$0xff] %v1067
    %1108 = vst [vmem:[#allocation2 + $0xf0] sm:$0xff] %v1072
    %1109 = vst [vmem:[#allocation2 + $0xf8] sm:$0xff] %v1075
    // Predicated region
    $region30: #{mlp_forward.1} parent=1 // pred_check
      _
    $region31: #{mlp_forward.1} parent=1 // pred_check_branch
      %1111 = sbr.rel (0) target = $region33
    $region32: #{mlp_forward.1} parent=1 // pred_region
      %s1113 = ssub.s32 4096, 4096
      %1114 = vsyncadd [#allocation3], %s1113
      %s1115 = sshll.u32 [#allocation2], 4
      %s1116 = int_to_ptr.vmem [resolvable:$true] %s1115
      %1121 = dma.vmem_to_hbm [thread:$0]  %s1116, 4096, %s7, [#allocation3], 128, 128, 8
    $region33: #{mlp_forward.1} parent=1 // pred_fallthru
      _
    // Predicated region
    $region34: #{mlp_forward.1} parent=1 // pred_check
      _
    $region35: #{mlp_forward.1} parent=1 // pred_check_branch
      %1123 = sbr.rel (0) target = $region37
    $region36: #{mlp_forward.1} parent=1 // pred_region
      %1124 = dma.done [#allocation3], 4096
    $region37: #{mlp_forward.1} parent=1 // pred_fallthru
      _
    %1125 = vsyncpa [#allocation3], 1

</llo_original>
